<compile_context>
chip_gen: v7x
topology: tpu7x:2x2x1
jax: 0.10.0
libtpu: 0.0.40
codegen_flags: <defaults>
</compile_context>

<pallas_src>
import functools

import jax
import jax.numpy as jnp
from jax.experimental import pallas as pl
from jax.experimental.pallas import tpu as pltpu


_LANE = 128          # TPU lane width
_SUBLANE = 8         # f32 sublane packing
_MAX_HW_TILE = 512   # 512 lanes ≈ 85% of HBM roofline; tile stays small enough
                     # for v7x's 64 MiB VMEM even with C up to a few thousand.


def _round_up(a, m):
    return (a + m - 1) // m * m


def _stats_kernel(x_ref, sum_ref, sq_ref):
    """Accumulate per-(n, c) sum and sum-of-squares over the HW (lane) axis."""
    @pl.when(pl.program_id(1) == 0)
    def _():
        sum_ref[...] = jnp.zeros_like(sum_ref)
        sq_ref[...] = jnp.zeros_like(sq_ref)

    x = x_ref[...].astype(jnp.float32)                     # (C_pad, hw_tile)
    sum_ref[...] += jnp.sum(x, axis=1, keepdims=True)      # (C_pad, 1)
    sq_ref[...] += jnp.sum(x * x, axis=1, keepdims=True)   # (C_pad, 1)


def _norm_kernel(x_ref, istd_ref, astd_ref, w_ref, b_ref, v_ref, y_ref, *,
                 apply_act):
    """y = (x / max(x*v + inst_std, act_std)) * w + b, lane-dense store."""
    x = x_ref[...].astype(jnp.float32)                     # (C_pad, hw_tile)
    if apply_act:
        d = x * v_ref[...] + istd_ref[...]                 # bcast (C_pad,1)
        d = jnp.maximum(d, astd_ref[...])
        x = x * pl.reciprocal(d, approx=False)             # divide -> EUP
    y_ref[...] = (x * w_ref[...] + b_ref[...]).astype(y_ref.dtype)


def evonorm_batch2d(x, weight, bias, v, running_var, *,
                    training=True, apply_act=True, momentum=0.1, eps=1e-5):
    """x: (N, C, H, W); params: (1, C, 1, 1). Returns (y, new_running_var)."""
    N, C, H, W = x.shape
    HW = H * W
    out_dtype = x.dtype

    if v is None:  # apply_act=False modules have no v parameter
        v = jnp.ones((1, C, 1, 1), jnp.float32)

    # --- tiling: C on sublanes (pad to mult of 8), HW on lanes (mult of 128)
    c_pad = _round_up(C, _SUBLANE)
    hw_tile = min(_MAX_HW_TILE, _round_up(HW, _LANE))
    hw_pad = _round_up(HW, hw_tile)
    n_hw = hw_pad // hw_tile

    xr = x.reshape(N, C, HW)
    if c_pad != C or hw_pad != HW:
        # zero padding is stats-neutral (adds nothing to sum / sum-of-squares)
        xr = jnp.pad(xr, ((0, 0), (0, c_pad - C), (0, hw_pad - HW)))

    x_spec = pl.BlockSpec((None, c_pad, hw_tile), lambda n, h: (n, 0, h))
    nc_spec = pl.BlockSpec((None, c_pad, 1), lambda n, h: (n, 0, 0))
    c_spec = pl.BlockSpec((c_pad, 1), lambda n, h: (0, 0))

    def cparams(sem):
        return pltpu.CompilerParams(dimension_semantics=sem,
                                    vmem_limit_bytes=32 * 1024 * 1024)

    rv_flat = running_var.reshape(C).astype(jnp.float32)

    need_stats = training or apply_act
    if need_stats:
        # ---- pass 1: fused per-(n, c) sum / sum-of-squares over HW ----------
        sums, sqs = pl.pallas_call(
            _stats_kernel,
            grid=(N, n_hw),
            in_specs=[x_spec],
            out_specs=(nc_spec, nc_spec),
            out_shape=(jax.ShapeDtypeStruct((N, c_pad, 1), jnp.float32),
                       jax.ShapeDtypeStruct((N, c_pad, 1), jnp.float32)),
            compiler_params=cparams(("parallel", "arbitrary")),
        )(xr)

        sum_nc = sums[:, :C, 0]                            # (N, C)
        sq_nc = sqs[:, :C, 0]
        hw_f = jnp.float32(HW)
        mean_nc = sum_nc / hw_f
        var_nc = jnp.maximum(sq_nc / hw_f - mean_nc * mean_nc, 0.0)
    else:
        mean_nc = jnp.zeros((N, C), jnp.float32)
        var_nc = jnp.zeros((N, C), jnp.float32)

    if training:
        # per-channel batch variance via the law of total variance
        mean_c = jnp.mean(mean_nc, axis=0)                 # (C,)
        var_c = jnp.mean(var_nc + (mean_nc - mean_c) ** 2, axis=0)
        n_elems = N * HW
        bessel = n_elems / max(n_elems - 1, 1)             # guard n == 1
        rv_new = var_c * (momentum * bessel) + rv_flat * (1.0 - momentum)
        var_act = var_c
    else:
        rv_new = rv_flat
        var_act = rv_flat

    # ---- pass 2: tiled, lane-dense normalize + affine ------------------------
    def pad_c(a, fill=0.0):
        return jnp.pad(a.astype(jnp.float32), (0, c_pad - C),
                       constant_values=fill).reshape(c_pad, 1)

    inst_std = jnp.pad(jnp.sqrt(var_nc + eps), ((0, 0), (0, c_pad - C)),
                       constant_values=1.0).reshape(N, c_pad, 1)
    act_std = pad_c(jnp.sqrt(var_act + eps), fill=1.0)
    w_p = pad_c(weight.reshape(C))
    b_p = pad_c(bias.reshape(C))
    v_p = pad_c(v.reshape(C))

    y = pl.pallas_call(
        functools.partial(_norm_kernel, apply_act=apply_act),
        grid=(N, n_hw),
        in_specs=[x_spec, nc_spec, c_spec, c_spec, c_spec, c_spec],
        out_specs=x_spec,
        out_shape=jax.ShapeDtypeStruct((N, c_pad, hw_pad), out_dtype),
        compiler_params=cparams(("parallel", "parallel")),
    )(xr, inst_std, act_std, w_p, b_p, v_p)

    y = y[:, :C, :HW].reshape(N, C, H, W)
    return y, rv_new.reshape(1, C, 1, 1).astype(running_var.dtype)


def _reference(x, weight, bias, v, running_var, *,
               training=True, apply_act=True, momentum=0.1, eps=1e-5):
    """Pure-JAX port of the PyTorch forward, for verification."""
    if training:
        var = jnp.var(x, axis=(0, 2, 3), keepdims=True)
        n = x.size / x.shape[1]
        rv_new = var * momentum * (n / (n - 1)) + running_var * (1 - momentum)
    else:
        var = running_var
        rv_new = running_var
    if apply_act:
        d = x * v + jnp.sqrt(jnp.var(x, axis=(2, 3), keepdims=True) + eps)
        d = jnp.maximum(d, jnp.sqrt(var + eps))
        x = x / d
    return x * weight + bias, rv_new


if __name__ == "__main__":
    key = jax.random.PRNGKey(0)
    N, C, H, W = 2, 4, 16, 16

    x = jax.random.normal(key, (N, C, H, W), dtype=jnp.float32)

    # Deterministic parameter init per EvoNormBatch2d.reset_parameters():
    param_shape = (1, C, 1, 1)
    weight = jnp.ones(param_shape, jnp.float32)
    bias = jnp.zeros(param_shape, jnp.float32)
    v = jnp.ones(param_shape, jnp.float32)
    running_var = jnp.ones(param_shape, jnp.float32)

    # Training-mode forward (default module state).
    y, rv_new = evonorm_batch2d(x, weight, bias, v, running_var,
                                training=True, apply_act=True)
    jax.block_until_ready((y, rv_new))
    y_ref, rv_ref = _reference(x, weight, bias, v, running_var,
                               training=True, apply_act=True)
    assert y.shape == (N, C, H, W) and y.dtype == x.dtype
    assert jnp.allclose(y, y_ref, atol=1e-5, rtol=1e-5)
    assert jnp.allclose(rv_new, rv_ref, atol=1e-5, rtol=1e-5)

    # Eval-mode forward (uses running_var instead of batch var).
    y_e, rv_e = evonorm_batch2d(x, weight, bias, v, running_var,
                                training=False, apply_act=True)
    jax.block_until_ready((y_e, rv_e))
    y_eref, rv_eref = _reference(x, weight, bias, v, running_var,
                                 training=False, apply_act=True)
    assert jnp.allclose(y_e, y_eref, atol=1e-5, rtol=1e-5)
    assert jnp.allclose(rv_e, rv_eref, atol=1e-6, rtol=1e-6)

    print("KERNEL_OK")
</pallas_src>

<mosaic_0001>
module attributes {stable_mosaic.version = 11 : i64} {
  func.func @_stats_kernel(%arg0: i32, %arg1: i32, %arg2: memref<1x8x256xf32, #tpu.memory_space<vmem>>, %arg3: memref<1x8x1xf32, #tpu.memory_space<vmem>>, %arg4: memref<1x8x1xf32, #tpu.memory_space<vmem>>) attributes {dimension_semantics = [#tpu.dimension_semantics<parallel>, #tpu.dimension_semantics<arbitrary>], iteration_bounds = array<i64: 2, 1>, scalar_prefetch = 0 : i64, scratch_operands = 0 : i64, tpu.core_type = #tpu.core_type<tc>, window_params = [{transform_indices = @transform_0, window_bounds = array<i64: 1, 8, 256>}, {transform_indices = @transform_1, window_bounds = array<i64: 1, 8, 1>}, {transform_indices = @transform_2, window_bounds = array<i64: 1, 8, 1>}]} {
    %c0_i32 = arith.constant 0 : i32
    %0 = arith.cmpi eq, %arg1, %c0_i32 : i32
    %1 = arith.extui %0 : i1 to i32
    %c0_i32_0 = arith.constant 0 : i32
    %2 = arith.cmpi ne, %1, %c0_i32_0 : i32
    scf.if %2 {
      %cst_16 = arith.constant 0.000000e+00 : f32
      %22 = vector.broadcast %cst_16 : f32 to vector<8x1xf32>
      %c0_17 = arith.constant 0 : index
      %c0_18 = arith.constant 0 : index
      %c0_19 = arith.constant 0 : index
      %23 = vector.load %arg3[%c0_17, %c0_18, %c0_19] : memref<1x8x1xf32, #tpu.memory_space<vmem>>, vector<1x8x1xf32>
      %24 = vector.shape_cast %23 : vector<1x8x1xf32> to vector<8x1xf32>
      %25 = vector.shape_cast %22 : vector<8x1xf32> to vector<1x8x1xf32>
      tpu.vector_store %arg3[%c0_17, %c0_18, %c0_19], %25 {strides = array<i32>} : memref<1x8x1xf32, #tpu.memory_space<vmem>>, vector<1x8x1xf32>,
      %cst_20 = arith.constant 0.000000e+00 : f32
      %26 = vector.broadcast %cst_20 : f32 to vector<8x1xf32>
      %c0_21 = arith.constant 0 : index
      %c0_22 = arith.constant 0 : index
      %c0_23 = arith.constant 0 : index
      %27 = vector.load %arg4[%c0_21, %c0_22, %c0_23] : memref<1x8x1xf32, #tpu.memory_space<vmem>>, vector<1x8x1xf32>
      %28 = vector.shape_cast %27 : vector<1x8x1xf32> to vector<8x1xf32>
      %29 = vector.shape_cast %26 : vector<8x1xf32> to vector<1x8x1xf32>
      tpu.vector_store %arg4[%c0_21, %c0_22, %c0_23], %29 {strides = array<i32>} : memref<1x8x1xf32, #tpu.memory_space<vmem>>, vector<1x8x1xf32>,
    } else {
    }
    %c0 = arith.constant 0 : index
    %c0_1 = arith.constant 0 : index
    %c0_2 = arith.constant 0 : index
    %3 = vector.load %arg2[%c0, %c0_1, %c0_2] : memref<1x8x256xf32, #tpu.memory_space<vmem>>, vector<1x8x256xf32>
    %4 = vector.shape_cast %3 : vector<1x8x256xf32> to vector<8x256xf32>
    %c0_3 = arith.constant 0 : index
    %c0_4 = arith.constant 0 : index
    %c0_5 = arith.constant 0 : index
    %5 = vector.load %arg3[%c0_3, %c0_4, %c0_5] : memref<1x8x1xf32, #tpu.memory_space<vmem>>, vector<1x8x1xf32>
    %6 = vector.shape_cast %5 : vector<1x8x1xf32> to vector<8x1xf32>
    %cst = arith.constant dense<0.000000e+00> : vector<8xf32>
    %7 = vector.multi_reduction <add>, %4, %cst [1] : vector<8x256xf32> to vector<8xf32>
    %8 = vector.shape_cast %7 : vector<8xf32> to vector<8x1xf32>
    %9 = arith.addf %6, %8 : vector<8x1xf32>
    %c0_6 = arith.constant 0 : index
    %c0_7 = arith.constant 0 : index
    %c0_8 = arith.constant 0 : index
    %10 = vector.load %arg3[%c0_6, %c0_7, %c0_8] : memref<1x8x1xf32, #tpu.memory_space<vmem>>, vector<1x8x1xf32>
    %11 = vector.shape_cast %10 : vector<1x8x1xf32> to vector<8x1xf32>
    %12 = vector.shape_cast %9 : vector<8x1xf32> to vector<1x8x1xf32>
    tpu.vector_store %arg3[%c0_6, %c0_7, %c0_8], %12 {strides = array<i32>} : memref<1x8x1xf32, #tpu.memory_space<vmem>>, vector<1x8x1xf32>,
    %c0_9 = arith.constant 0 : index
    %c0_10 = arith.constant 0 : index
    %c0_11 = arith.constant 0 : index
    %13 = vector.load %arg4[%c0_9, %c0_10, %c0_11] : memref<1x8x1xf32, #tpu.memory_space<vmem>>, vector<1x8x1xf32>
    %14 = vector.shape_cast %13 : vector<1x8x1xf32> to vector<8x1xf32>
    %15 = arith.mulf %4, %4 : vector<8x256xf32>
    %cst_12 = arith.constant dense<0.000000e+00> : vector<8xf32>
    %16 = vector.multi_reduction <add>, %15, %cst_12 [1] : vector<8x256xf32> to vector<8xf32>
    %17 = vector.shape_cast %16 : vector<8xf32> to vector<8x1xf32>
    %18 = arith.addf %14, %17 : vector<8x1xf32>
    %c0_13 = arith.constant 0 : index
    %c0_14 = arith.constant 0 : index
    %c0_15 = arith.constant 0 : index
    %19 = vector.load %arg4[%c0_13, %c0_14, %c0_15] : memref<1x8x1xf32, #tpu.memory_space<vmem>>, vector<1x8x1xf32>
    %20 = vector.shape_cast %19 : vector<1x8x1xf32> to vector<8x1xf32>
    %21 = vector.shape_cast %18 : vector<8x1xf32> to vector<1x8x1xf32>
    tpu.vector_store %arg4[%c0_13, %c0_14, %c0_15], %21 {strides = array<i32>} : memref<1x8x1xf32, #tpu.memory_space<vmem>>, vector<1x8x1xf32>,
    return
  }
  func.func @transform_0(%arg0: i32, %arg1: i32) -> (i32, i32, i32) {
    %c0_i32 = arith.constant 0 : i32
    %c0_i32_0 = arith.constant 0 : i32
    return %arg0, %c0_i32, %arg1 : i32, i32, i32
  }
  func.func @transform_1(%arg0: i32, %arg1: i32) -> (i32, i32, i32) {
    %c0_i32 = arith.constant 0 : i32
    %c0_i32_0 = arith.constant 0 : i32
    %c0_i32_1 = arith.constant 0 : i32
    return %arg0, %c0_i32, %c0_i32_0 : i32, i32, i32
  }
  func.func @transform_2(%arg0: i32, %arg1: i32) -> (i32, i32, i32) {
    %c0_i32 = arith.constant 0 : i32
    %c0_i32_0 = arith.constant 0 : i32
    %c0_i32_1 = arith.constant 0 : i32
    return %arg0, %c0_i32, %c0_i32_0 : i32, i32, i32
  }
}

</mosaic_0001>

<llo_original>
// kernel: tpu_custom_call.1
$region0: #{tpu_custom_call.1}
  #allocation0 [shape = 'u32[]', space=smem, size = 0x4, offset = 0x4, fixed_abs, tag = 'smem constant byte address 0x4 - core index']
  #allocation1 [shape = 'u32[144,128]{1,0:T(1,128)}', space=vmem, size = 0x12000, scoped, tag = 'internal scratch']
  %s0 = inlined_call_operand.hbm [shape: f32[2,8,256], index: 0, kind: input, shape index: {}]
  %s1 = inlined_call_operand.vmem [shape: f32[2,8,1], index: 1, kind: output, shape index: {0}]
  %s2 = inlined_call_operand.vmem [shape: f32[2,8,1], index: 2, kind: output, shape index: {1}]
  %3 = xla_tuple %s1, %s2
  %s4 = sld [smem:[#allocation0]]
  $region53: #{tpu_custom_call.1} parent=0
    _
  %s6 = ssub.s32 1, %s4
  %s7 = scalar_select 0, %s6, %s4
  $region1: #{tpu_custom_call.1} parent=0
    #allocation2 [shape = 'u8[16384]{0}', space=vmem, size = 0x4000, scoped, tag = 'input window, operand 0']
    #allocation3 [shape = 's32[2]{0}', space=sflag, size = 0x8, scoped, tag = 'scoped memory for tpu_custom_call.1']
    %8 = vsyncpa [#allocation3], 0
    %s9 = scalar_lea.sflag [#allocation3], 1
    %10 = vsyncpa %s9, 0
    loop: start=0, step=1, limit=4
    $region2: #{tpu_custom_call.1} parent=1 // loop_pre_header
      _
    $region3: #{tpu_custom_call.1} parent=1 // loop_header
      %s12 = sphi 0, %s16
      %p13 = scmp.ge.s32.totalorder %s12, 4
      %s19 = sphi 0, %s31
      %s20 = sphi 0, %s27
      %s21 = sphi 0, %s19
      %s22 = sphi 0, %s20
      %s23 = sphi 0, %s21
      %s24 = sphi 0, %s22
      %s36 = sphi 0, %s38
      %s39 = sphi 0, %s36
      %s40 = sphi 0, %s39
      %s56 = sphi 0, %s40
      %s62 = sphi 0, %s64
      %s65 = sphi 0, %s62
      %s66 = sphi 0, %s65
      %s82 = sphi 0, %s66
      %s88 = sphi 0, %s90
      %s91 = sphi 0, %s88
      %s92 = sphi 0, %s91
      %s108 = sphi 0, %s92
    $region4: #{tpu_custom_call.1} parent=1 // loop_header_branch
      %15 = sbr.rel (%p13) target = $region8
    $region5: #{tpu_custom_call.1} parent=1 // loop_body
      %s17 = ssub.s32 %s12, 1
      %s18 = ssub.s32 %s12, 2
      %s25 = sadd.s32 1, %s20
      %p26 = scmp.ge.s32.totalorder %s25, 1
      %s27 = scalar_select %p26, 0, %s25
      %s28 = sadd.s32 1, %s19
      %s29 = scalar_select %p26, %s28, %s19
      %p30 = scmp.ge.s32.totalorder %s29, 2
      %s31 = scalar_select %p30, 0, %s29
      %s32 = ssub.s32 %s19, %s31
      %s33 = ssub.s32 %s20, %s27
      %s34 = sor.u32 %s32, %s33
      %p35 = scmp.eq.s32.totalorder %s34, 0
      %s37 = sadd.s32 %s36, 1
      %s38 = scalar_select %p35, %s36, %s37
      %p41 = pneg %p35
      %p42 = scmp.eq.s32.totalorder %s12, 1
      %p43 = por %p41, %p42
      %p44 = scmp.ne.s32.totalorder %s36, %s39
      %p45 = scmp.eq.s32.totalorder %s12, 0
      %p46 = por %p44, %p45
      %p47 = scmp.ne.s32.totalorder %s36, %s39
      %p48 = scmp.eq.s32.totalorder %s17, 1
      %p49 = por %p47, %p48
      %p50 = scmp.ne.s32.totalorder %s39, %s40
      %p51 = scmp.eq.s32.totalorder %s17, 0
      %p52 = por %p50, %p51
      %p53 = scmp.ne.s32.totalorder %s39, %s40
      %p54 = scmp.eq.s32.totalorder %s18, 1
      %p55 = por %p53, %p54
      %p57 = scmp.ne.s32.totalorder %s40, %s56
      %p58 = scmp.eq.s32.totalorder %s18, 0
      %p59 = por %p57, %p58
      %s60 = ssub.s32 %s19, %s31
      %p61 = scmp.eq.s32.totalorder %s60, 0
      %s63 = sadd.s32 %s62, 1
      %s64 = scalar_select %p61, %s62, %s63
      %p67 = pneg %p61
      %p68 = scmp.eq.s32.totalorder %s12, 1
      %p69 = por %p67, %p68
      %p70 = scmp.ne.s32.totalorder %s62, %s65
      %p71 = scmp.eq.s32.totalorder %s12, 0
      %p72 = por %p70, %p71
      %p73 = scmp.ne.s32.totalorder %s62, %s65
      %p74 = scmp.eq.s32.totalorder %s17, 1
      %p75 = por %p73, %p74
      %p76 = scmp.ne.s32.totalorder %s65, %s66
      %p77 = scmp.eq.s32.totalorder %s17, 0
      %p78 = por %p76, %p77
      %p79 = scmp.ne.s32.totalorder %s65, %s66
      %p80 = scmp.eq.s32.totalorder %s18, 1
      %p81 = por %p79, %p80
      %p83 = scmp.ne.s32.totalorder %s66, %s82
      %p84 = scmp.eq.s32.totalorder %s18, 0
      %p85 = por %p83, %p84
      %s86 = ssub.s32 %s19, %s31
      %p87 = scmp.eq.s32.totalorder %s86, 0
      %s89 = sadd.s32 %s88, 1
      %s90 = scalar_select %p87, %s88, %s89
      %p93 = pneg %p87
      %p94 = scmp.eq.s32.totalorder %s12, 1
      %p95 = por %p93, %p94
      %p96 = scmp.ne.s32.totalorder %s88, %s91
      %p97 = scmp.eq.s32.totalorder %s12, 0
      %p98 = por %p96, %p97
      %p99 = scmp.ne.s32.totalorder %s88, %s91
      %p100 = scmp.eq.s32.totalorder %s17, 1
      %p101 = por %p99, %p100
      %p102 = scmp.ne.s32.totalorder %s91, %s92
      %p103 = scmp.eq.s32.totalorder %s17, 0
      %p104 = por %p102, %p103
      %p105 = scmp.ne.s32.totalorder %s91, %s92
      %p106 = scmp.eq.s32.totalorder %s18, 1
      %p107 = por %p105, %p106
      %p109 = scmp.ne.s32.totalorder %s92, %s108
      %p110 = scmp.eq.s32.totalorder %s18, 0
      %p111 = por %p109, %p110
      %p112 = scmp.le.s32.totalorder 1, %s12
      %p113 = scmp.lt.s32.totalorder %s12, 3
      %p114 = pnand %p112, %p113
      %p115 = pneg %p114
      // Predicated region
      $region9: #{tpu_custom_call.1} parent=5 // pred_check
        _
      $region10: #{tpu_custom_call.1} parent=5 // pred_check_branch
        %117 = sbr.rel (%p114) target = $region12
      $region11: #{tpu_custom_call.1} parent=5 // pred_region
        %s118 = ssub.s32 %s12, 1
      $region12: #{tpu_custom_call.1} parent=5 // pred_fallthru
        _
      %p119 = scmp.lt.s32.totalorder %s12, 2
      // Predicated region
      $region13: #{tpu_custom_call.1} parent=5 // pred_check
        %p120 = pneg %p119
      $region14: #{tpu_custom_call.1} parent=5 // pred_check_branch
        %122 = sbr.rel (%p120) target = $region16
      $region15: #{tpu_custom_call.1} parent=5 // pred_region
        // Predicated region
        $region17: #{tpu_custom_call.1} parent=15 // pred_check
          %p123 = pneg %p46
        $region18: #{tpu_custom_call.1} parent=15 // pred_check_branch
          %125 = sbr.rel (%p123) target = $region20
        $region19: #{tpu_custom_call.1} parent=15 // pred_region
          %s126 = sand.u32 %s36, 1
          %s127 = scalar_lea.sflag [#allocation3], %s126
          %s128 = sand.u32 %s36, 1
          %s129 = smul.addr %s128, 16
          %s130 = scalar_lea.vmem [#allocation2], %s129
          %s131 = smul.u32 2, %s20
          %s133 = ssub.s32 256, 256
          %134 = vsyncadd %s127, %s133
          %s135 = smul.addr %s19, 2
          %s136 = sadd.s32 %s131, %s135
          %s137 = smul.addr %s136, 128
          %s138 = scalar_lea.hbm %s0, %s137
          %s140 = sshll.u32 %s130, 4
          %s141 = int_to_ptr.vmem [resolvable:$true] %s140
          %143 = dma.hbm_to_vmem [thread:$0]  %s138, 256, %s141, %s127
        $region20: #{tpu_custom_call.1} parent=15 // pred_fallthru
          _
      $region16: #{tpu_custom_call.1} parent=5 // pred_fallthru
        _
      %p144 = scmp.le.s32.totalorder 1, %s12
      %p145 = scmp.lt.s32.totalorder %s12, 3
      %p146 = pnand %p144, %p145
      %p147 = pneg %p146
      // Predicated region
      $region21: #{tpu_custom_call.1} parent=5 // pred_check
        _
      $region22: #{tpu_custom_call.1} parent=5 // pred_check_branch
        %149 = sbr.rel (%p146) target = $region24
      $region23: #{tpu_custom_call.1} parent=5 // pred_region
        %s150 = ssub.s32 %s12, 1
        %s151 = sand.u32 %s39, 1
        %s152 = scalar_lea.sflag [#allocation3], %s151
        %s153 = sand.u32 %s39, 1
        %s154 = smul.addr %s153, 16
        %s155 = scalar_lea.vmem [#allocation2], %s154
        // Predicated region
        $region25: #{tpu_custom_call.1} parent=23 // pred_check
          %p156 = pneg %p52
        $region26: #{tpu_custom_call.1} parent=23 // pred_check_branch
          %158 = sbr.rel (%p156) target = $region28
        $region27: #{tpu_custom_call.1} parent=23 // pred_region
          %159 = dma.done %s152, 256
        $region28: #{tpu_custom_call.1} parent=23 // pred_fallthru
          _
        %s160 = sand.u32 %s39, 1
        %s161 = scalar_lea.sflag [#allocation3], %s160
        %s162 = sand.u32 %s39, 1
        %s163 = smul.addr %s162, 16
        %s164 = scalar_lea.vmem [#allocation2], %s163
        %p165 = pneg %p52
        %p166 = pneg %p49
        %p167 = pneg %p78
        %p168 = pneg %p75
        %p169 = scmp.lt.s32.totalorder %s21, 1
        %s170 = scalar_select %p169, %s21, 1
        %s171 = smul.addr %s170, 8
        %s172 = scalar_lea.vmem %s1, %s171
        %p173 = pneg %p104
        %p174 = pneg %p101
        %p175 = scmp.lt.s32.totalorder %s21, 1
        %s176 = scalar_select %p175, %s21, 1
        %s177 = smul.addr %s176, 8
        %s178 = scalar_lea.vmem %s2, %s177
        %s179 = smul.u32 2, %s22
        %p180 = scmp.lt.s32.totalorder %s21, 1
        %s181 = scalar_select %p180, %s21, 1
        %s182 = smul.addr %s181, 8
        %s183 = scalar_lea.vmem %s1, %s182
        %p184 = scmp.lt.s32.totalorder %s21, 1
        %s185 = scalar_select %p184, %s21, 1
        %s186 = smul.addr %s185, 8
        %s187 = scalar_lea.vmem %s2, %s186
        %p188 = scmp.eq.s32.totalorder %s22, 0
        // Predicated region
        $region29: #{tpu_custom_call.1} parent=23 // pred_check
          %p189 = pneg %p188
        $region30: #{tpu_custom_call.1} parent=23 // pred_check_branch
          %191 = sbr.rel (%p189) target = $region32
        $region31: #{tpu_custom_call.1} parent=23 // pred_region
          %vm192 = vcmask 7168
          %193 = vst.msk [vmem:[%s183] sm:$0xff] %vm192, 0.0
          %194 = vst.msk [vmem:[%s187] sm:$0xff] %vm192, 0.0
        $region32: #{tpu_custom_call.1} parent=23 // pred_fallthru
          _
        %v195 = vld [vmem:[%s155] sm:$0xff]
        %v196 = vld [vmem:[%s155 + $0x8] sm:$0xff]
        %v197 = vld [vmem:[%s183] sm:$0xff]
        %v198 = vadd.f32 %v195, %v196
        %199 = vadd.xlane.f32.xlu0 %v198
        %v200 = vpop.xlane.xlu0 %199
        %v201 = vadd.f32 %v197, %v200
        %vm202 = vcmask 7168
        %203 = vst.msk [vmem:[%s183] sm:$0xff] %vm202, %v201
        %v204 = vld [vmem:[%s187] sm:$0xff]
        %v205 = vmul.f32 %v195, %v195
        %v206 = vmul.f32 %v196, %v196
        %v207 = vadd.f32 %v205, %v206
        %208 = vadd.xlane.f32.xlu0 %v207
        %v209 = vpop.xlane.xlu0 %208
        %v210 = vadd.f32 %v204, %v209
        %211 = vst.msk [vmem:[%s187] sm:$0xff] %vm202, %v210
        %p212 = scmp.lt.s32.totalorder %s21, 1
        %s213 = scalar_select %p212, %s21, 1
        %s214 = smul.addr %s213, 8
        %s215 = scalar_lea.vmem %s1, %s214
        %p216 = scmp.lt.s32.totalorder %s21, 1
        %s217 = scalar_select %p216, %s21, 1
        %s218 = smul.addr %s217, 8
        %s219 = scalar_lea.vmem %s2, %s218
        // Predicated region
        $region33: #{tpu_custom_call.1} parent=23 // pred_check
          %p220 = pneg %p75
        $region34: #{tpu_custom_call.1} parent=23 // pred_check_branch
          %222 = sbr.rel (%p220) target = $region36
        $region35: #{tpu_custom_call.1} parent=23 // pred_region
          _
        $region36: #{tpu_custom_call.1} parent=23 // pred_fallthru
          _
        // Predicated region
        $region37: #{tpu_custom_call.1} parent=23 // pred_check
          %p223 = pneg %p101
        $region38: #{tpu_custom_call.1} parent=23 // pred_check_branch
          %225 = sbr.rel (%p223) target = $region40
        $region39: #{tpu_custom_call.1} parent=23 // pred_region
          _
        $region40: #{tpu_custom_call.1} parent=23 // pred_fallthru
          _
      $region24: #{tpu_custom_call.1} parent=5 // pred_fallthru
        _
      %p226 = scmp.le.s32.totalorder 2, %s12
      // Predicated region
      $region41: #{tpu_custom_call.1} parent=5 // pred_check
        %p227 = pneg %p226
      $region42: #{tpu_custom_call.1} parent=5 // pred_check_branch
        %229 = sbr.rel (%p227) target = $region44
      $region43: #{tpu_custom_call.1} parent=5 // pred_region
        %s230 = ssub.s32 %s12, 2
        // Predicated region
        $region45: #{tpu_custom_call.1} parent=43 // pred_check
          %p231 = pneg %p81
        $region46: #{tpu_custom_call.1} parent=43 // pred_check_branch
          %233 = sbr.rel (%p231) target = $region48
        $region47: #{tpu_custom_call.1} parent=43 // pred_region
          %p234 = scmp.lt.s32.totalorder %s23, 1
          %s235 = scalar_select %p234, %s23, 1
          %s236 = smul.addr %s235, 8
          %s237 = scalar_lea.vmem %s1, %s236
        $region48: #{tpu_custom_call.1} parent=43 // pred_fallthru
          _
        // Predicated region
        $region49: #{tpu_custom_call.1} parent=43 // pred_check
          %p238 = pneg %p107
        $region50: #{tpu_custom_call.1} parent=43 // pred_check_branch
          %240 = sbr.rel (%p238) target = $region52
        $region51: #{tpu_custom_call.1} parent=43 // pred_region
          %p241 = scmp.lt.s32.totalorder %s23, 1
          %s242 = scalar_select %p241, %s23, 1
          %s243 = smul.addr %s242, 8
          %s244 = scalar_lea.vmem %s2, %s243
        $region52: #{tpu_custom_call.1} parent=43 // pred_fallthru
          _
      $region44: #{tpu_custom_call.1} parent=5 // pred_fallthru
        _
    $region6: #{tpu_custom_call.1} parent=1 // loop_footer
      %s16 = sadd.s32 1, %s12
    $region7: #{tpu_custom_call.1} parent=1 // loop_footer_branch
      %11 = sbr.rel target = $region3
    $region8: #{tpu_custom_call.1} parent=1 // loop_exit
      _
    %245 = vsyncpa [#allocation3], 1
    %s246 = scalar_lea.sflag [#allocation3], 1
    %247 = vsyncpa %s246, 1

</llo_original>
